<compile_context>
chip_gen: v7x
topology: tpu7x:2x2x1
jax: 0.10.0
libtpu: 0.0.40
codegen_flags: <defaults>
</compile_context>

<pallas_src>
import jax
import jax.numpy as jnp
from jax.experimental import pallas as pl
from jax.experimental.pallas import tpu as pltpu

B, L, H, C = 2, 8, 32, 7          # batch, seq, hidden_size, num_classes
HP = 128                          # hidden lane-padded (pooler output width)
CP = 128                          # num_classes lane-padded (classifier output width)
VOCAB, TYPE_VOCAB = 100, 2


def bert_classifier_kernel(
        tok_ref, seg_ref, vl_ref,            # scalar prefetch (SMEM)
        wemb_ref, temb_ref,                  # embedding tables (VMEM resident)
        wp_ref, bp_ref, wc_ref, bc_ref,      # dense weights (VMEM, lane-padded)
        out_ref,                             # (B, CP) logits block
        hid_buf):                            # (B*L, H) gathered embeddings
    # --- fused embedding gather: dynamic-index VMEM reads, no HBM DMAs -------
    for i in range(B * L):
        b, l = divmod(i, L)
        t = tok_ref[b, l]
        s = seg_ref[b, l]
        hid_buf[pl.ds(i, 1), :] = (wemb_ref[pl.ds(t, 1), :]
                                   + temb_ref[pl.ds(s, 1), :])

    # --- gen_attention_mask folded (with 1/len) into a (B, B*L) weight matrix
    col = jax.lax.broadcasted_iota(jnp.int32, (B, B * L), 1)
    row = jax.lax.broadcasted_iota(jnp.int32, (B, B * L), 0)
    w = jnp.zeros((B, B * L), jnp.float32)
    for b in range(B):                                   # static, B is tiny
        vlb = jnp.clip(vl_ref[b], 0, L)                  # scalar int32
        denom = jnp.maximum(vlb, 1).astype(jnp.float32)  # guard vl == 0
        active = (row == b) & (col >= b * L) & (col < b * L + vlb)
        w = jnp.where(active, 1.0 / denom, w)

    # Masked mean for the whole batch as a single MXU contraction.
    mean = jnp.dot(w, hid_buf[...], preferred_element_type=jnp.float32)   # (B, H)

    # TODO(synk): the full multi-layer BERT encoder is an *external* module passed
    # into BERTClassifier.__init__ and is not defined by this module; a deterministic
    # masked-mean -> dense -> tanh pooler stands in for bert(...)[1].
    pooled = jnp.tanh(
        jnp.dot(mean, wp_ref[...], preferred_element_type=jnp.float32)
        + bp_ref[...])                                                    # (B, HP)

    # nn.Dropout(p=dr_rate): identity in eval mode.  Classifier (lane-padded).
    out_ref[...] = (
        jnp.dot(pooled, wc_ref[...], preferred_element_type=jnp.float32)
        + bc_ref[...])                                                    # (B, CP)


def bert_classifier_forward(token_ids, valid_length, segment_ids, params):
    grid_spec = pltpu.PrefetchScalarGridSpec(
        num_scalar_prefetch=3,                # token_ids, segment_ids, valid_length
        grid=(1,),                            # whole batch in one grid step
        in_specs=[
            pl.BlockSpec((VOCAB, H), lambda i, *_: (0, 0)),       # word_emb (VMEM)
            pl.BlockSpec((TYPE_VOCAB, H), lambda i, *_: (0, 0)),  # type_emb (VMEM)
            pl.BlockSpec((H, HP), lambda i, *_: (0, 0)),          # w_pool (padded)
            pl.BlockSpec((1, HP), lambda i, *_: (0, 0)),          # b_pool (padded)
            pl.BlockSpec((HP, CP), lambda i, *_: (0, 0)),         # w_cls  (padded)
            pl.BlockSpec((1, CP), lambda i, *_: (0, 0)),          # b_cls  (padded)
        ],
        out_specs=pl.BlockSpec((B, CP), lambda i, *_: (0, 0)),    # full-array block
        scratch_shapes=[
            pltpu.VMEM((B * L, H), jnp.float32),                  # gathered rows
        ],
    )
    logits_padded = pl.pallas_call(
        bert_classifier_kernel,
        out_shape=jax.ShapeDtypeStruct((B, CP), jnp.float32),
        grid_spec=grid_spec,
        compiler_params=pltpu.CompilerParams(
            dimension_semantics=("arbitrary",)),
    )(token_ids.astype(jnp.int32),
      segment_ids.astype(jnp.int32),
      valid_length.astype(jnp.int32),
      params["word_emb"], params["type_emb"],
      params["w_pool_pad"], params["b_pool_pad"],
      params["w_cls_pad"], params["b_cls_pad"])
    return logits_padded[:, :C]


def bert_classifier_reference(token_ids, valid_length, segment_ids, params):
    hid = (params["word_emb"][token_ids]
           + params["type_emb"][segment_ids]).astype(jnp.float32)
    pos = jnp.arange(L)[None, :]
    mask = (pos < valid_length[:, None]).astype(jnp.float32)
    denom = jnp.maximum(mask.sum(1, keepdims=True), 1.0)
    mean = (hid * mask[:, :, None]).sum(1) / denom
    hp = jax.lax.Precision.HIGHEST
    pooled = jnp.tanh(jnp.dot(mean, params["w_pool"], precision=hp)
                      + params["b_pool"])
    return jnp.dot(pooled, params["w_cls"], precision=hp) + params["b_cls"]


def make_params(key):
    ks = jax.random.split(key, 6)
    w_pool = jax.random.normal(ks[2], (H, H), jnp.float32) * 0.05
    b_pool = jax.random.normal(ks[3], (1, H), jnp.float32) * 0.01
    w_cls = jax.random.normal(ks[4], (H, C), jnp.float32) * 0.05
    b_cls = jax.random.normal(ks[5], (1, C), jnp.float32) * 0.01
    return {
        "word_emb": jax.random.normal(ks[0], (VOCAB, H), jnp.float32) * 0.02,
        "type_emb": jax.random.normal(ks[1], (TYPE_VOCAB, H), jnp.float32) * 0.02,
        "w_pool": w_pool, "b_pool": b_pool,
        "w_cls": w_cls, "b_cls": b_cls,
        # Lane-padded (zero-filled) copies so every kernel matmul output and the
        # final store are full-width; zero padding keeps the math exact.
        "w_pool_pad": jnp.zeros((H, HP), jnp.float32).at[:, :H].set(w_pool),
        "b_pool_pad": jnp.zeros((1, HP), jnp.float32).at[:, :H].set(b_pool),
        "w_cls_pad":  jnp.zeros((HP, CP), jnp.float32).at[:H, :C].set(w_cls),
        "b_cls_pad":  jnp.zeros((1, CP), jnp.float32).at[:, :C].set(b_cls),
    }


if __name__ == "__main__":
    key = jax.random.PRNGKey(0)
    k_tok, k_seg, k_len, k_par = jax.random.split(key, 4)

    token_ids = jax.random.randint(k_tok, (B, L), 0, VOCAB, dtype=jnp.int32)
    segment_ids = jax.random.randint(k_seg, (B, L), 0, TYPE_VOCAB, dtype=jnp.int32)
    valid_length = jax.random.randint(k_len, (B,), 1, L + 1, dtype=jnp.int32)
    params = make_params(k_par)

    logits = bert_classifier_forward(token_ids, valid_length, segment_ids, params)
    logits = jax.block_until_ready(logits)

    ref = bert_classifier_reference(token_ids, valid_length, segment_ids, params)
    assert logits.shape == (B, C)
    assert jnp.allclose(logits, ref, atol=1e-4, rtol=1e-4)
    print("KERNEL_OK")
</pallas_src>

<mosaic_0001>
module attributes {stable_mosaic.version = 11 : i64} {
  func.func @bert_classifier_kernel(%arg0: i32, %arg1: memref<2x8xi32, #tpu.memory_space<smem>>, %arg2: memref<2x8xi32, #tpu.memory_space<smem>>, %arg3: memref<2xi32, #tpu.memory_space<smem>>, %arg4: memref<100x32xf32, #tpu.memory_space<vmem>>, %arg5: memref<2x32xf32, #tpu.memory_space<vmem>>, %arg6: memref<32x128xf32, #tpu.memory_space<vmem>>, %arg7: memref<1x128xf32, #tpu.memory_space<vmem>>, %arg8: memref<128x128xf32, #tpu.memory_space<vmem>>, %arg9: memref<1x128xf32, #tpu.memory_space<vmem>>, %arg10: memref<2x128xf32, #tpu.memory_space<vmem>>, %arg11: memref<16x32xf32, #tpu.memory_space<vmem>>) attributes {dimension_semantics = [#tpu.dimension_semantics<arbitrary>], iteration_bounds = array<i64: 1>, scalar_prefetch = 3 : i64, scratch_operands = 1 : i64, tpu.core_type = #tpu.core_type<tc>, window_params = [{pipeline_mode = #tpu.pipeline_mode<synchronous>, transform_indices = @transform_0, window_bounds = array<i64: 100, 32>}, {pipeline_mode = #tpu.pipeline_mode<synchronous>, transform_indices = @transform_1, window_bounds = array<i64: 2, 32>}, {pipeline_mode = #tpu.pipeline_mode<synchronous>, transform_indices = @transform_2, window_bounds = array<i64: 32, 128>}, {pipeline_mode = #tpu.pipeline_mode<synchronous>, transform_indices = @transform_3, window_bounds = array<i64: 1, 128>}, {pipeline_mode = #tpu.pipeline_mode<synchronous>, transform_indices = @transform_4, window_bounds = array<i64: 128, 128>}, {pipeline_mode = #tpu.pipeline_mode<synchronous>, transform_indices = @transform_5, window_bounds = array<i64: 1, 128>}, {pipeline_mode = #tpu.pipeline_mode<synchronous>, transform_indices = @transform_6, window_bounds = array<i64: 2, 128>}]} {
    %c0 = arith.constant 0 : index
    %c0_0 = arith.constant 0 : index
    %0 = memref.load %arg1[%c0, %c0_0] : memref<2x8xi32, #tpu.memory_space<smem>>
    %c0_1 = arith.constant 0 : index
    %c0_2 = arith.constant 0 : index
    %1 = memref.load %arg2[%c0_1, %c0_2] : memref<2x8xi32, #tpu.memory_space<smem>>
    %2 = arith.index_cast %0 : i32 to index
    %c0_3 = arith.constant 0 : index
    %3 = vector.load %arg4[%2, %c0_3] : memref<100x32xf32, #tpu.memory_space<vmem>>, vector<1x32xf32>
    %4 = arith.index_cast %1 : i32 to index
    %c0_4 = arith.constant 0 : index
    %5 = vector.load %arg5[%4, %c0_4] : memref<2x32xf32, #tpu.memory_space<vmem>>, vector<1x32xf32>
    %6 = arith.addf %3, %5 : vector<1x32xf32>
    %c0_5 = arith.constant 0 : index
    %c0_6 = arith.constant 0 : index
    %7 = vector.load %arg11[%c0_5, %c0_6] : memref<16x32xf32, #tpu.memory_space<vmem>>, vector<1x32xf32>
    tpu.vector_store %arg11[%c0_5, %c0_6], %6 {strides = array<i32>} : memref<16x32xf32, #tpu.memory_space<vmem>>, vector<1x32xf32>,
    %c0_7 = arith.constant 0 : index
    %c1 = arith.constant 1 : index
    %8 = memref.load %arg1[%c0_7, %c1] : memref<2x8xi32, #tpu.memory_space<smem>>
    %c0_8 = arith.constant 0 : index
    %c1_9 = arith.constant 1 : index
    %9 = memref.load %arg2[%c0_8, %c1_9] : memref<2x8xi32, #tpu.memory_space<smem>>
    %10 = arith.index_cast %8 : i32 to index
    %c0_10 = arith.constant 0 : index
    %11 = vector.load %arg4[%10, %c0_10] : memref<100x32xf32, #tpu.memory_space<vmem>>, vector<1x32xf32>
    %12 = arith.index_cast %9 : i32 to index
    %c0_11 = arith.constant 0 : index
    %13 = vector.load %arg5[%12, %c0_11] : memref<2x32xf32, #tpu.memory_space<vmem>>, vector<1x32xf32>
    %14 = arith.addf %11, %13 : vector<1x32xf32>
    %c1_12 = arith.constant 1 : index
    %c0_13 = arith.constant 0 : index
    %15 = vector.load %arg11[%c1_12, %c0_13] : memref<16x32xf32, #tpu.memory_space<vmem>>, vector<1x32xf32>
    tpu.vector_store %arg11[%c1_12, %c0_13], %14 {strides = array<i32>} : memref<16x32xf32, #tpu.memory_space<vmem>>, vector<1x32xf32>,
    %c0_14 = arith.constant 0 : index
    %c2 = arith.constant 2 : index
    %16 = memref.load %arg1[%c0_14, %c2] : memref<2x8xi32, #tpu.memory_space<smem>>
    %c0_15 = arith.constant 0 : index
    %c2_16 = arith.constant 2 : index
    %17 = memref.load %arg2[%c0_15, %c2_16] : memref<2x8xi32, #tpu.memory_space<smem>>
    %18 = arith.index_cast %16 : i32 to index
    %c0_17 = arith.constant 0 : index
    %19 = vector.load %arg4[%18, %c0_17] : memref<100x32xf32, #tpu.memory_space<vmem>>, vector<1x32xf32>
    %20 = arith.index_cast %17 : i32 to index
    %c0_18 = arith.constant 0 : index
    %21 = vector.load %arg5[%20, %c0_18] : memref<2x32xf32, #tpu.memory_space<vmem>>, vector<1x32xf32>
    %22 = arith.addf %19, %21 : vector<1x32xf32>
    %c2_19 = arith.constant 2 : index
    %c0_20 = arith.constant 0 : index
    %23 = vector.load %arg11[%c2_19, %c0_20] : memref<16x32xf32, #tpu.memory_space<vmem>>, vector<1x32xf32>
    tpu.vector_store %arg11[%c2_19, %c0_20], %22 {strides = array<i32>} : memref<16x32xf32, #tpu.memory_space<vmem>>, vector<1x32xf32>,
    %c0_21 = arith.constant 0 : index
    %c3 = arith.constant 3 : index
    %24 = memref.load %arg1[%c0_21, %c3] : memref<2x8xi32, #tpu.memory_space<smem>>
    %c0_22 = arith.constant 0 : index
    %c3_23 = arith.constant 3 : index
    %25 = memref.load %arg2[%c0_22, %c3_23] : memref<2x8xi32, #tpu.memory_space<smem>>
    %26 = arith.index_cast %24 : i32 to index
    %c0_24 = arith.constant 0 : index
    %27 = vector.load %arg4[%26, %c0_24] : memref<100x32xf32, #tpu.memory_space<vmem>>, vector<1x32xf32>
    %28 = arith.index_cast %25 : i32 to index
    %c0_25 = arith.constant 0 : index
    %29 = vector.load %arg5[%28, %c0_25] : memref<2x32xf32, #tpu.memory_space<vmem>>, vector<1x32xf32>
    %30 = arith.addf %27, %29 : vector<1x32xf32>
    %c3_26 = arith.constant 3 : index
    %c0_27 = arith.constant 0 : index
    %31 = vector.load %arg11[%c3_26, %c0_27] : memref<16x32xf32, #tpu.memory_space<vmem>>, vector<1x32xf32>
    tpu.vector_store %arg11[%c3_26, %c0_27], %30 {strides = array<i32>} : memref<16x32xf32, #tpu.memory_space<vmem>>, vector<1x32xf32>,
    %c0_28 = arith.constant 0 : index
    %c4 = arith.constant 4 : index
    %32 = memref.load %arg1[%c0_28, %c4] : memref<2x8xi32, #tpu.memory_space<smem>>
    %c0_29 = arith.constant 0 : index
    %c4_30 = arith.constant 4 : index
    %33 = memref.load %arg2[%c0_29, %c4_30] : memref<2x8xi32, #tpu.memory_space<smem>>
    %34 = arith.index_cast %32 : i32 to index
    %c0_31 = arith.constant 0 : index
    %35 = vector.load %arg4[%34, %c0_31] : memref<100x32xf32, #tpu.memory_space<vmem>>, vector<1x32xf32>
    %36 = arith.index_cast %33 : i32 to index
    %c0_32 = arith.constant 0 : index
    %37 = vector.load %arg5[%36, %c0_32] : memref<2x32xf32, #tpu.memory_space<vmem>>, vector<1x32xf32>
    %38 = arith.addf %35, %37 : vector<1x32xf32>
    %c4_33 = arith.constant 4 : index
    %c0_34 = arith.constant 0 : index
    %39 = vector.load %arg11[%c4_33, %c0_34] : memref<16x32xf32, #tpu.memory_space<vmem>>, vector<1x32xf32>
    tpu.vector_store %arg11[%c4_33, %c0_34], %38 {strides = array<i32>} : memref<16x32xf32, #tpu.memory_space<vmem>>, vector<1x32xf32>,
    %c0_35 = arith.constant 0 : index
    %c5 = arith.constant 5 : index
    %40 = memref.load %arg1[%c0_35, %c5] : memref<2x8xi32, #tpu.memory_space<smem>>
    %c0_36 = arith.constant 0 : index
    %c5_37 = arith.constant 5 : index
    %41 = memref.load %arg2[%c0_36, %c5_37] : memref<2x8xi32, #tpu.memory_space<smem>>
    %42 = arith.index_cast %40 : i32 to index
    %c0_38 = arith.constant 0 : index
    %43 = vector.load %arg4[%42, %c0_38] : memref<100x32xf32, #tpu.memory_space<vmem>>, vector<1x32xf32>
    %44 = arith.index_cast %41 : i32 to index
    %c0_39 = arith.constant 0 : index
    %45 = vector.load %arg5[%44, %c0_39] : memref<2x32xf32, #tpu.memory_space<vmem>>, vector<1x32xf32>
    %46 = arith.addf %43, %45 : vector<1x32xf32>
    %c5_40 = arith.constant 5 : index
    %c0_41 = arith.constant 0 : index
    %47 = vector.load %arg11[%c5_40, %c0_41] : memref<16x32xf32, #tpu.memory_space<vmem>>, vector<1x32xf32>
    tpu.vector_store %arg11[%c5_40, %c0_41], %46 {strides = array<i32>} : memref<16x32xf32, #tpu.memory_space<vmem>>, vector<1x32xf32>,
    %c0_42 = arith.constant 0 : index
    %c6 = arith.constant 6 : index
    %48 = memref.load %arg1[%c0_42, %c6] : memref<2x8xi32, #tpu.memory_space<smem>>
    %c0_43 = arith.constant 0 : index
    %c6_44 = arith.constant 6 : index
    %49 = memref.load %arg2[%c0_43, %c6_44] : memref<2x8xi32, #tpu.memory_space<smem>>
    %50 = arith.index_cast %48 : i32 to index
    %c0_45 = arith.constant 0 : index
    %51 = vector.load %arg4[%50, %c0_45] : memref<100x32xf32, #tpu.memory_space<vmem>>, vector<1x32xf32>
    %52 = arith.index_cast %49 : i32 to index
    %c0_46 = arith.constant 0 : index
    %53 = vector.load %arg5[%52, %c0_46] : memref<2x32xf32, #tpu.memory_space<vmem>>, vector<1x32xf32>
    %54 = arith.addf %51, %53 : vector<1x32xf32>
    %c6_47 = arith.constant 6 : index
    %c0_48 = arith.constant 0 : index
    %55 = vector.load %arg11[%c6_47, %c0_48] : memref<16x32xf32, #tpu.memory_space<vmem>>, vector<1x32xf32>
    tpu.vector_store %arg11[%c6_47, %c0_48], %54 {strides = array<i32>} : memref<16x32xf32, #tpu.memory_space<vmem>>, vector<1x32xf32>,
    %c0_49 = arith.constant 0 : index
    %c7 = arith.constant 7 : index
    %56 = memref.load %arg1[%c0_49, %c7] : memref<2x8xi32, #tpu.memory_space<smem>>
    %c0_50 = arith.constant 0 : index
    %c7_51 = arith.constant 7 : index
    %57 = memref.load %arg2[%c0_50, %c7_51] : memref<2x8xi32, #tpu.memory_space<smem>>
    %58 = arith.index_cast %56 : i32 to index
    %c0_52 = arith.constant 0 : index
    %59 = vector.load %arg4[%58, %c0_52] : memref<100x32xf32, #tpu.memory_space<vmem>>, vector<1x32xf32>
    %60 = arith.index_cast %57 : i32 to index
    %c0_53 = arith.constant 0 : index
    %61 = vector.load %arg5[%60, %c0_53] : memref<2x32xf32, #tpu.memory_space<vmem>>, vector<1x32xf32>
    %62 = arith.addf %59, %61 : vector<1x32xf32>
    %c7_54 = arith.constant 7 : index
    %c0_55 = arith.constant 0 : index
    %63 = vector.load %arg11[%c7_54, %c0_55] : memref<16x32xf32, #tpu.memory_space<vmem>>, vector<1x32xf32>
    tpu.vector_store %arg11[%c7_54, %c0_55], %62 {strides = array<i32>} : memref<16x32xf32, #tpu.memory_space<vmem>>, vector<1x32xf32>,
    %c1_56 = arith.constant 1 : index
    %c0_57 = arith.constant 0 : index
    %64 = memref.load %arg1[%c1_56, %c0_57] : memref<2x8xi32, #tpu.memory_space<smem>>
    %c1_58 = arith.constant 1 : index
    %c0_59 = arith.constant 0 : index
    %65 = memref.load %arg2[%c1_58, %c0_59] : memref<2x8xi32, #tpu.memory_space<smem>>
    %66 = arith.index_cast %64 : i32 to index
    %c0_60 = arith.constant 0 : index
    %67 = vector.load %arg4[%66, %c0_60] : memref<100x32xf32, #tpu.memory_space<vmem>>, vector<1x32xf32>
    %68 = arith.index_cast %65 : i32 to index
    %c0_61 = arith.constant 0 : index
    %69 = vector.load %arg5[%68, %c0_61] : memref<2x32xf32, #tpu.memory_space<vmem>>, vector<1x32xf32>
    %70 = arith.addf %67, %69 : vector<1x32xf32>
    %c8 = arith.constant 8 : index
    %c0_62 = arith.constant 0 : index
    %71 = vector.load %arg11[%c8, %c0_62] : memref<16x32xf32, #tpu.memory_space<vmem>>, vector<1x32xf32>
    tpu.vector_store %arg11[%c8, %c0_62], %70 {strides = array<i32>} : memref<16x32xf32, #tpu.memory_space<vmem>>, vector<1x32xf32>,
    %c1_63 = arith.constant 1 : index
    %c1_64 = arith.constant 1 : index
    %72 = memref.load %arg1[%c1_63, %c1_64] : memref<2x8xi32, #tpu.memory_space<smem>>
    %c1_65 = arith.constant 1 : index
    %c1_66 = arith.constant 1 : index
    %73 = memref.load %arg2[%c1_65, %c1_66] : memref<2x8xi32, #tpu.memory_space<smem>>
    %74 = arith.index_cast %72 : i32 to index
    %c0_67 = arith.constant 0 : index
    %75 = vector.load %arg4[%74, %c0_67] : memref<100x32xf32, #tpu.memory_space<vmem>>, vector<1x32xf32>
    %76 = arith.index_cast %73 : i32 to index
    %c0_68 = arith.constant 0 : index
    %77 = vector.load %arg5[%76, %c0_68] : memref<2x32xf32, #tpu.memory_space<vmem>>, vector<1x32xf32>
    %78 = arith.addf %75, %77 : vector<1x32xf32>
    %c9 = arith.constant 9 : index
    %c0_69 = arith.constant 0 : index
    %79 = vector.load %arg11[%c9, %c0_69] : memref<16x32xf32, #tpu.memory_space<vmem>>, vector<1x32xf32>
    tpu.vector_store %arg11[%c9, %c0_69], %78 {strides = array<i32>} : memref<16x32xf32, #tpu.memory_space<vmem>>, vector<1x32xf32>,
    %c1_70 = arith.constant 1 : index
    %c2_71 = arith.constant 2 : index
    %80 = memref.load %arg1[%c1_70, %c2_71] : memref<2x8xi32, #tpu.memory_space<smem>>
    %c1_72 = arith.constant 1 : index
    %c2_73 = arith.constant 2 : index
    %81 = memref.load %arg2[%c1_72, %c2_73] : memref<2x8xi32, #tpu.memory_space<smem>>
    %82 = arith.index_cast %80 : i32 to index
    %c0_74 = arith.constant 0 : index
    %83 = vector.load %arg4[%82, %c0_74] : memref<100x32xf32, #tpu.memory_space<vmem>>, vector<1x32xf32>
    %84 = arith.index_cast %81 : i32 to index
    %c0_75 = arith.constant 0 : index
    %85 = vector.load %arg5[%84, %c0_75] : memref<2x32xf32, #tpu.memory_space<vmem>>, vector<1x32xf32>
    %86 = arith.addf %83, %85 : vector<1x32xf32>
    %c10 = arith.constant 10 : index
    %c0_76 = arith.constant 0 : index
    %87 = vector.load %arg11[%c10, %c0_76] : memref<16x32xf32, #tpu.memory_space<vmem>>, vector<1x32xf32>
    tpu.vector_store %arg11[%c10, %c0_76], %86 {strides = array<i32>} : memref<16x32xf32, #tpu.memory_space<vmem>>, vector<1x32xf32>,
    %c1_77 = arith.constant 1 : index
    %c3_78 = arith.constant 3 : index
    %88 = memref.load %arg1[%c1_77, %c3_78] : memref<2x8xi32, #tpu.memory_space<smem>>
    %c1_79 = arith.constant 1 : index
    %c3_80 = arith.constant 3 : index
    %89 = memref.load %arg2[%c1_79, %c3_80] : memref<2x8xi32, #tpu.memory_space<smem>>
    %90 = arith.index_cast %88 : i32 to index
    %c0_81 = arith.constant 0 : index
    %91 = vector.load %arg4[%90, %c0_81] : memref<100x32xf32, #tpu.memory_space<vmem>>, vector<1x32xf32>
    %92 = arith.index_cast %89 : i32 to index
    %c0_82 = arith.constant 0 : index
    %93 = vector.load %arg5[%92, %c0_82] : memref<2x32xf32, #tpu.memory_space<vmem>>, vector<1x32xf32>
    %94 = arith.addf %91, %93 : vector<1x32xf32>
    %c11 = arith.constant 11 : index
    %c0_83 = arith.constant 0 : index
    %95 = vector.load %arg11[%c11, %c0_83] : memref<16x32xf32, #tpu.memory_space<vmem>>, vector<1x32xf32>
    tpu.vector_store %arg11[%c11, %c0_83], %94 {strides = array<i32>} : memref<16x32xf32, #tpu.memory_space<vmem>>, vector<1x32xf32>,
    %c1_84 = arith.constant 1 : index
    %c4_85 = arith.constant 4 : index
    %96 = memref.load %arg1[%c1_84, %c4_85] : memref<2x8xi32, #tpu.memory_space<smem>>
    %c1_86 = arith.constant 1 : index
    %c4_87 = arith.constant 4 : index
    %97 = memref.load %arg2[%c1_86, %c4_87] : memref<2x8xi32, #tpu.memory_space<smem>>
    %98 = arith.index_cast %96 : i32 to index
    %c0_88 = arith.constant 0 : index
    %99 = vector.load %arg4[%98, %c0_88] : memref<100x32xf32, #tpu.memory_space<vmem>>, vector<1x32xf32>
    %100 = arith.index_cast %97 : i32 to index
    %c0_89 = arith.constant 0 : index
    %101 = vector.load %arg5[%100, %c0_89] : memref<2x32xf32, #tpu.memory_space<vmem>>, vector<1x32xf32>
    %102 = arith.addf %99, %101 : vector<1x32xf32>
    %c12 = arith.constant 12 : index
    %c0_90 = arith.constant 0 : index
    %103 = vector.load %arg11[%c12, %c0_90] : memref<16x32xf32, #tpu.memory_space<vmem>>, vector<1x32xf32>
    tpu.vector_store %arg11[%c12, %c0_90], %102 {strides = array<i32>} : memref<16x32xf32, #tpu.memory_space<vmem>>, vector<1x32xf32>,
    %c1_91 = arith.constant 1 : index
    %c5_92 = arith.constant 5 : index
    %104 = memref.load %arg1[%c1_91, %c5_92] : memref<2x8xi32, #tpu.memory_space<smem>>
    %c1_93 = arith.constant 1 : index
    %c5_94 = arith.constant 5 : index
    %105 = memref.load %arg2[%c1_93, %c5_94] : memref<2x8xi32, #tpu.memory_space<smem>>
    %106 = arith.index_cast %104 : i32 to index
    %c0_95 = arith.constant 0 : index
    %107 = vector.load %arg4[%106, %c0_95] : memref<100x32xf32, #tpu.memory_space<vmem>>, vector<1x32xf32>
    %108 = arith.index_cast %105 : i32 to index
    %c0_96 = arith.constant 0 : index
    %109 = vector.load %arg5[%108, %c0_96] : memref<2x32xf32, #tpu.memory_space<vmem>>, vector<1x32xf32>
    %110 = arith.addf %107, %109 : vector<1x32xf32>
    %c13 = arith.constant 13 : index
    %c0_97 = arith.constant 0 : index
    %111 = vector.load %arg11[%c13, %c0_97] : memref<16x32xf32, #tpu.memory_space<vmem>>, vector<1x32xf32>
    tpu.vector_store %arg11[%c13, %c0_97], %110 {strides = array<i32>} : memref<16x32xf32, #tpu.memory_space<vmem>>, vector<1x32xf32>,
    %c1_98 = arith.constant 1 : index
    %c6_99 = arith.constant 6 : index
    %112 = memref.load %arg1[%c1_98, %c6_99] : memref<2x8xi32, #tpu.memory_space<smem>>
    %c1_100 = arith.constant 1 : index
    %c6_101 = arith.constant 6 : index
    %113 = memref.load %arg2[%c1_100, %c6_101] : memref<2x8xi32, #tpu.memory_space<smem>>
    %114 = arith.index_cast %112 : i32 to index
    %c0_102 = arith.constant 0 : index
    %115 = vector.load %arg4[%114, %c0_102] : memref<100x32xf32, #tpu.memory_space<vmem>>, vector<1x32xf32>
    %116 = arith.index_cast %113 : i32 to index
    %c0_103 = arith.constant 0 : index
    %117 = vector.load %arg5[%116, %c0_103] : memref<2x32xf32, #tpu.memory_space<vmem>>, vector<1x32xf32>
    %118 = arith.addf %115, %117 : vector<1x32xf32>
    %c14 = arith.constant 14 : index
    %c0_104 = arith.constant 0 : index
    %119 = vector.load %arg11[%c14, %c0_104] : memref<16x32xf32, #tpu.memory_space<vmem>>, vector<1x32xf32>
    tpu.vector_store %arg11[%c14, %c0_104], %118 {strides = array<i32>} : memref<16x32xf32, #tpu.memory_space<vmem>>, vector<1x32xf32>,
    %c1_105 = arith.constant 1 : index
    %c7_106 = arith.constant 7 : index
    %120 = memref.load %arg1[%c1_105, %c7_106] : memref<2x8xi32, #tpu.memory_space<smem>>
    %c1_107 = arith.constant 1 : index
    %c7_108 = arith.constant 7 : index
    %121 = memref.load %arg2[%c1_107, %c7_108] : memref<2x8xi32, #tpu.memory_space<smem>>
    %122 = arith.index_cast %120 : i32 to index
    %c0_109 = arith.constant 0 : index
    %123 = vector.load %arg4[%122, %c0_109] : memref<100x32xf32, #tpu.memory_space<vmem>>, vector<1x32xf32>
    %124 = arith.index_cast %121 : i32 to index
    %c0_110 = arith.constant 0 : index
    %125 = vector.load %arg5[%124, %c0_110] : memref<2x32xf32, #tpu.memory_space<vmem>>, vector<1x32xf32>
    %126 = arith.addf %123, %125 : vector<1x32xf32>
    %c15 = arith.constant 15 : index
    %c0_111 = arith.constant 0 : index
    %127 = vector.load %arg11[%c15, %c0_111] : memref<16x32xf32, #tpu.memory_space<vmem>>, vector<1x32xf32>
    tpu.vector_store %arg11[%c15, %c0_111], %126 {strides = array<i32>} : memref<16x32xf32, #tpu.memory_space<vmem>>, vector<1x32xf32>,
    %128 = tpu.iota {dimensions = array<i32: 1>} : vector<2x16xi32>
    %129 = tpu.iota {dimensions = array<i32: 0>} : vector<2x16xi32>
    %cst = arith.constant 0.000000e+00 : f32
    %130 = vector.broadcast %cst : f32 to vector<2x16xf32>
    %c0_112 = arith.constant 0 : index
    %131 = memref.load %arg3[%c0_112] : memref<2xi32, #tpu.memory_space<smem>>
    %c0_i32 = arith.constant 0 : i32
    %c8_i32 = arith.constant 8 : i32
    %132 = arith.maxsi %c0_i32, %131 : i32
    %133 = arith.minsi %c8_i32, %132 : i32
    %c1_i32 = arith.constant 1 : i32
    %134 = arith.maxsi %133, %c1_i32 : i32
    %135 = arith.sitofp %134 : i32 to f32
    %c0_i32_113 = arith.constant 0 : i32
    %136 = vector.broadcast %c0_i32_113 : i32 to vector<2x16xi32>
    %137 = arith.cmpi eq, %129, %136 : vector<2x16xi32>
    %c0_i32_114 = arith.constant 0 : i32
    %138 = vector.broadcast %c0_i32_114 : i32 to vector<2x16xi32>
    %139 = arith.cmpi sge, %128, %138 : vector<2x16xi32>
    %140 = arith.andi %137, %139 : vector<2x16xi1>
    %c0_i32_115 = arith.constant 0 : i32
    %141 = arith.addi %c0_i32_115, %133 : i32
    %142 = vector.broadcast %141 : i32 to vector<2x16xi32>
    %143 = arith.cmpi slt, %128, %142 : vector<2x16xi32>
    %144 = arith.andi %140, %143 : vector<2x16xi1>
    %cst_116 = arith.constant 1.000000e+00 : f32
    %145 = arith.divf %cst_116, %135 : f32
    %146 = vector.broadcast %145 : f32 to vector<2x16xf32>
    %147 = arith.select %144, %146, %130 : vector<2x16xi1>, vector<2x16xf32>
    %c1_117 = arith.constant 1 : index
    %148 = memref.load %arg3[%c1_117] : memref<2xi32, #tpu.memory_space<smem>>
    %c0_i32_118 = arith.constant 0 : i32
    %c8_i32_119 = arith.constant 8 : i32
    %149 = arith.maxsi %c0_i32_118, %148 : i32
    %150 = arith.minsi %c8_i32_119, %149 : i32
    %c1_i32_120 = arith.constant 1 : i32
    %151 = arith.maxsi %150, %c1_i32_120 : i32
    %152 = arith.sitofp %151 : i32 to f32
    %c1_i32_121 = arith.constant 1 : i32
    %153 = vector.broadcast %c1_i32_121 : i32 to vector<2x16xi32>
    %154 = arith.cmpi eq, %129, %153 : vector<2x16xi32>
    %c8_i32_122 = arith.constant 8 : i32
    %155 = vector.broadcast %c8_i32_122 : i32 to vector<2x16xi32>
    %156 = arith.cmpi sge, %128, %155 : vector<2x16xi32>
    %157 = arith.andi %154, %156 : vector<2x16xi1>
    %c8_i32_123 = arith.constant 8 : i32
    %158 = arith.addi %c8_i32_123, %150 : i32
    %159 = vector.broadcast %158 : i32 to vector<2x16xi32>
    %160 = arith.cmpi slt, %128, %159 : vector<2x16xi32>
    %161 = arith.andi %157, %160 : vector<2x16xi1>
    %cst_124 = arith.constant 1.000000e+00 : f32
    %162 = arith.divf %cst_124, %152 : f32
    %163 = vector.broadcast %162 : f32 to vector<2x16xf32>
    %164 = arith.select %161, %163, %147 : vector<2x16xi1>, vector<2x16xf32>
    %c0_125 = arith.constant 0 : index
    %c0_126 = arith.constant 0 : index
    %165 = vector.load %arg11[%c0_125, %c0_126] : memref<16x32xf32, #tpu.memory_space<vmem>>, vector<16x32xf32>
    %cst_127 = arith.constant dense<0.000000e+00> : vector<2x32xf32>
    %166 = tpu.matmul %164, %165, %cst_127 {dimension_numbers = #tpu.dot_dimension_numbers<[1], [0], [0], [1], [0, 0, 1, 1], [], []>} : vector<2x16xf32>, vector<16x32xf32>, vector<2x32xf32> -> vector<2x32xf32>
    %c0_128 = arith.constant 0 : index
    %c0_129 = arith.constant 0 : index
    %167 = vector.load %arg6[%c0_128, %c0_129] : memref<32x128xf32, #tpu.memory_space<vmem>>, vector<32x128xf32>
    %cst_130 = arith.constant dense<0.000000e+00> : vector<2x128xf32>
    %168 = tpu.matmul %166, %167, %cst_130 {dimension_numbers = #tpu.dot_dimension_numbers<[1], [0], [0], [1], [0, 0, 1, 1], [], []>} : vector<2x32xf32>, vector<32x128xf32>, vector<2x128xf32> -> vector<2x128xf32>
    %c0_131 = arith.constant 0 : index
    %c0_132 = arith.constant 0 : index
    %169 = vector.load %arg7[%c0_131, %c0_132] : memref<1x128xf32, #tpu.memory_space<vmem>>, vector<1x128xf32>
    %170 = vector.broadcast %169 : vector<1x128xf32> to vector<2x128xf32>
    %171 = arith.addf %168, %170 : vector<2x128xf32>
    %172 = math.tanh %171 : vector<2x128xf32>
    %c0_133 = arith.constant 0 : index
    %c0_134 = arith.constant 0 : index
    %173 = vector.load %arg8[%c0_133, %c0_134] : memref<128x128xf32, #tpu.memory_space<vmem>>, vector<128x128xf32>
    %cst_135 = arith.constant dense<0.000000e+00> : vector<2x128xf32>
    %174 = tpu.matmul %172, %173, %cst_135 {dimension_numbers = #tpu.dot_dimension_numbers<[1], [0], [0], [1], [0, 0, 1, 1], [], []>} : vector<2x128xf32>, vector<128x128xf32>, vector<2x128xf32> -> vector<2x128xf32>
    %c0_136 = arith.constant 0 : index
    %c0_137 = arith.constant 0 : index
    %175 = vector.load %arg9[%c0_136, %c0_137] : memref<1x128xf32, #tpu.memory_space<vmem>>, vector<1x128xf32>
    %176 = vector.broadcast %175 : vector<1x128xf32> to vector<2x128xf32>
    %177 = arith.addf %174, %176 : vector<2x128xf32>
    %c0_138 = arith.constant 0 : index
    %c0_139 = arith.constant 0 : index
    %178 = vector.load %arg10[%c0_138, %c0_139] : memref<2x128xf32, #tpu.memory_space<vmem>>, vector<2x128xf32>
    tpu.vector_store %arg10[%c0_138, %c0_139], %177 {strides = array<i32>} : memref<2x128xf32, #tpu.memory_space<vmem>>, vector<2x128xf32>,
    return
  }
  func.func @transform_0(%arg0: i32, %arg1: memref<2x8xi32, #tpu.memory_space<smem>>, %arg2: memref<2x8xi32, #tpu.memory_space<smem>>, %arg3: memref<2xi32, #tpu.memory_space<smem>>) -> (i32, i32) {
    %c0_i32 = arith.constant 0 : i32
    %c0_i32_0 = arith.constant 0 : i32
    %c0_i32_1 = arith.constant 0 : i32
    return %c0_i32, %c0_i32_0 : i32, i32
  }
  func.func @transform_1(%arg0: i32, %arg1: memref<2x8xi32, #tpu.memory_space<smem>>, %arg2: memref<2x8xi32, #tpu.memory_space<smem>>, %arg3: memref<2xi32, #tpu.memory_space<smem>>) -> (i32, i32) {
    %c0_i32 = arith.constant 0 : i32
    %c0_i32_0 = arith.constant 0 : i32
    %c0_i32_1 = arith.constant 0 : i32
    return %c0_i32, %c0_i32_0 : i32, i32
  }
  func.func @transform_2(%arg0: i32, %arg1: memref<2x8xi32, #tpu.memory_space<smem>>, %arg2: memref<2x8xi32, #tpu.memory_space<smem>>, %arg3: memref<2xi32, #tpu.memory_space<smem>>) -> (i32, i32) {
    %c0_i32 = arith.constant 0 : i32
    %c0_i32_0 = arith.constant 0 : i32
    %c0_i32_1 = arith.constant 0 : i32
    return %c0_i32, %c0_i32_0 : i32, i32
  }
  func.func @transform_3(%arg0: i32, %arg1: memref<2x8xi32, #tpu.memory_space<smem>>, %arg2: memref<2x8xi32, #tpu.memory_space<smem>>, %arg3: memref<2xi32, #tpu.memory_space<smem>>) -> (i32, i32) {
    %c0_i32 = arith.constant 0 : i32
    %c0_i32_0 = arith.constant 0 : i32
    %c0_i32_1 = arith.constant 0 : i32
    return %c0_i32, %c0_i32_0 : i32, i32
  }
  func.func @transform_4(%arg0: i32, %arg1: memref<2x8xi32, #tpu.memory_space<smem>>, %arg2: memref<2x8xi32, #tpu.memory_space<smem>>, %arg3: memref<2xi32, #tpu.memory_space<smem>>) -> (i32, i32) {
    %c0_i32 = arith.constant 0 : i32
    %c0_i32_0 = arith.constant 0 : i32
    %c0_i32_1 = arith.constant 0 : i32
    return %c0_i32, %c0_i32_0 : i32, i32
  }
  func.func @transform_5(%arg0: i32, %arg1: memref<2x8xi32, #tpu.memory_space<smem>>, %arg2: memref<2x8xi32, #tpu.memory_space<smem>>, %arg3: memref<2xi32, #tpu.memory_space<smem>>) -> (i32, i32) {
    %c0_i32 = arith.constant 0 : i32
    %c0_i32_0 = arith.constant 0 : i32
    %c0_i32_1 = arith.constant 0 : i32
    return %c0_i32, %c0_i32_0 : i32, i32
  }
  func.func @transform_6(%arg0: i32, %arg1: memref<2x8xi32, #tpu.memory_space<smem>>, %arg2: memref<2x8xi32, #tpu.memory_space<smem>>, %arg3: memref<2xi32, #tpu.memory_space<smem>>) -> (i32, i32) {
    %c0_i32 = arith.constant 0 : i32
    %c0_i32_0 = arith.constant 0 : i32
    %c0_i32_1 = arith.constant 0 : i32
    return %c0_i32, %c0_i32_0 : i32, i32
  }
}

</mosaic_0001>

<llo_original>
// kernel: tpu_custom_call.1
$region0: #{tpu_custom_call.1}
  #allocation0 [shape = 'u32[]', space=smem, size = 0x4, offset = 0x4, fixed_abs, tag = 'smem constant byte address 0x4 - core index']
  #allocation1 [shape = 'u32[144,128]{1,0:T(1,128)}', space=vmem, size = 0x12000, scoped, tag = 'internal scratch']
  #allocation2 [shape = 'f32[16,32]{1,0:T(8,128)}', space=vmem, size = 0x2000, scoped, tag = 'scratch operand']
  #allocation3 [shape = 's32[1]{0}', space=sflag, size = 0x4, scoped, tag = 'scoped memory for tpu_custom_call.1']
  #allocation4 [shape = 'u8[1024]{0}', space=smem, size = 0x400, scoped, tag = 'prefetched SMEM operand 0']
  #allocation5 [shape = 'u8[1024]{0}', space=smem, size = 0x400, scoped, tag = 'prefetched SMEM operand 1']
  #allocation6 [shape = 'u8[512]{0}', space=smem, size = 0x200, scoped, tag = 'prefetched SMEM operand 2']
  %s0 = inlined_call_operand.vmem [shape: s32[2,8], index: 0, kind: input, shape index: {}]
  %s1 = inlined_call_operand.hbm [shape: s32[2,8], index: 1, kind: input, shape index: {}]
  %s2 = inlined_call_operand.hbm [shape: s32[2], index: 2, kind: input, shape index: {}]
  %s3 = inlined_call_operand.vmem [shape: f32[100,32], index: 3, kind: input, shape index: {}]
  %s4 = inlined_call_operand.hbm [shape: f32[2,32], index: 4, kind: input, shape index: {}]
  %s5 = inlined_call_operand.vmem [shape: f32[32,128], index: 5, kind: input, shape index: {}]
  %s6 = inlined_call_operand.hbm [shape: f32[1,128], index: 6, kind: input, shape index: {}]
  %s7 = inlined_call_operand.vmem [shape: f32[128,128], index: 7, kind: input, shape index: {}]
  %s8 = inlined_call_operand.vmem [shape: f32[1,128], index: 8, kind: input, shape index: {}]
  %s9 = inlined_call_operand.hbm [shape: f32[2,128], index: 9, kind: output, shape index: {}]
  %s10 = sld [smem:[#allocation0]]
  $region42: #{tpu_custom_call.1} parent=0
    _
  %s12 = ssub.s32 1, %s10
  %s13 = scalar_select 0, %s12, %s10
  %s14 = sshll.u32 %s0, 4
  %s15 = int_to_ptr.vmem [resolvable:$true] %s14
  %17 = dma.vmem_to_smem %s15, 32, [#allocation4], [#allocation3]
  %19 = dma.hbm_to_smem %s1, 32, [#allocation5], [#allocation3]
  %21 = dma.hbm_to_smem %s2, 16, [#allocation6], [#allocation3]
  %22 = dma.done [#allocation3], 80
  %23 = sfence
  $region1: #{tpu_custom_call.1} parent=0
    #allocation7 [shape = 'u8[1024]{0}', space=vmem, size = 0x400, scoped, tag = 'input window, operand 4, single buffered']
    #allocation8 [shape = 's32[1]{0}', space=sflag, size = 0x4, scoped, tag = 'scoped memory for tpu_custom_call.1']
    #allocation9 [shape = 's32[1]{0}', space=sflag, size = 0x4, scoped, tag = 'scoped memory for tpu_custom_call.1']
    #allocation10 [shape = 'u8[512]{0}', space=vmem, size = 0x400, scoped, tag = 'input window, operand 6, single buffered']
    #allocation11 [shape = 's32[1]{0}', space=sflag, size = 0x4, scoped, tag = 'scoped memory for tpu_custom_call.1']
    #allocation12 [shape = 'u8[1024]{0}', space=vmem, size = 0x400, scoped, tag = 'output window, operand 0, single buffered']
    %24 = vsyncpa [#allocation8], 0
    %25 = vsyncpa [#allocation11], 0
    %26 = vsyncpa [#allocation9], 0
    // Predicated region
    $region2: #{tpu_custom_call.1} parent=1 // pred_check
      _
    $region3: #{tpu_custom_call.1} parent=1 // pred_check_branch
      %28 = sbr.rel (0) target = $region5
    $region4: #{tpu_custom_call.1} parent=1 // pred_region
      _
    $region5: #{tpu_custom_call.1} parent=1 // pred_fallthru
      _
    // Predicated region
    $region6: #{tpu_custom_call.1} parent=1 // pred_check
      _
    $region7: #{tpu_custom_call.1} parent=1 // pred_check_branch
      %30 = sbr.rel (0) target = $region9
    $region8: #{tpu_custom_call.1} parent=1 // pred_region
      %s32 = ssub.s32 32, 32
      %33 = vsyncadd [#allocation8], %s32
      %s35 = sshll.u32 [#allocation7], 4
      %s36 = int_to_ptr.vmem [resolvable:$true] %s35
      %38 = dma.hbm_to_vmem [thread:$0]  %s4, 32, %s36, [#allocation8]
    $region9: #{tpu_custom_call.1} parent=1 // pred_fallthru
      _
    // Predicated region
    $region10: #{tpu_custom_call.1} parent=1 // pred_check
      _
    $region11: #{tpu_custom_call.1} parent=1 // pred_check_branch
      %40 = sbr.rel (0) target = $region13
    $region12: #{tpu_custom_call.1} parent=1 // pred_region
      _
    $region13: #{tpu_custom_call.1} parent=1 // pred_fallthru
      _
    // Predicated region
    $region14: #{tpu_custom_call.1} parent=1 // pred_check
      _
    $region15: #{tpu_custom_call.1} parent=1 // pred_check_branch
      %42 = sbr.rel (0) target = $region17
    $region16: #{tpu_custom_call.1} parent=1 // pred_region
      %s44 = ssub.s32 16, 16
      %45 = vsyncadd [#allocation11], %s44
      %s47 = sshll.u32 [#allocation10], 4
      %s48 = int_to_ptr.vmem [resolvable:$true] %s47
      %50 = dma.hbm_to_vmem [thread:$0]  %s6, 16, %s48, [#allocation11]
    $region17: #{tpu_custom_call.1} parent=1 // pred_fallthru
      _
    // Predicated region
    $region18: #{tpu_custom_call.1} parent=1 // pred_check
      _
    $region19: #{tpu_custom_call.1} parent=1 // pred_check_branch
      %52 = sbr.rel (0) target = $region21
    $region20: #{tpu_custom_call.1} parent=1 // pred_region
      _
    $region21: #{tpu_custom_call.1} parent=1 // pred_fallthru
      _
    // Predicated region
    $region22: #{tpu_custom_call.1} parent=1 // pred_check
      _
    $region23: #{tpu_custom_call.1} parent=1 // pred_check_branch
      %54 = sbr.rel (0) target = $region25
    $region24: #{tpu_custom_call.1} parent=1 // pred_region
      _
    $region25: #{tpu_custom_call.1} parent=1 // pred_fallthru
      _
    // Predicated region
    $region26: #{tpu_custom_call.1} parent=1 // pred_check
      _
    $region27: #{tpu_custom_call.1} parent=1 // pred_check_branch
      %56 = sbr.rel (0) target = $region29
    $region28: #{tpu_custom_call.1} parent=1 // pred_region
      %57 = dma.done [#allocation8], 32
    $region29: #{tpu_custom_call.1} parent=1 // pred_fallthru
      _
    // Predicated region
    $region30: #{tpu_custom_call.1} parent=1 // pred_check
      _
    $region31: #{tpu_custom_call.1} parent=1 // pred_check_branch
      %59 = sbr.rel (0) target = $region33
    $region32: #{tpu_custom_call.1} parent=1 // pred_region
      %60 = dma.done [#allocation11], 16
    $region33: #{tpu_custom_call.1} parent=1 // pred_fallthru
      _
    %s61 = sld [smem:[#allocation4]]
    %s62 = sld [smem:[#allocation5]]
    %s63 = scalar_lea.vmem %s3, %s61
    %v64 = vld [vmem:[%s63] sm:$0x1]
    %s65 = scalar_lea.vmem [#allocation7], %s62
    %v66 = vld [vmem:[%s65] sm:$0x1]
    %v67 = vadd.f32 %v64, %v66
    %vm68 = vcmask 253952
    %69 = vst.msk [vmem:[#allocation2] sm:$0x1] %vm68, %v67
    %s70 = sld [smem:[#allocation4 + $0x1]]
    %s71 = sld [smem:[#allocation5 + $0x1]]
    %s72 = scalar_lea.vmem %s3, %s70
    %v73 = vld [vmem:[%s72] sm:$0x1]
    %s74 = scalar_lea.vmem [#allocation7], %s71
    %v75 = vld [vmem:[%s74] sm:$0x1]
    %v76 = vadd.f32 %v73, %v75
    %77 = vst.msk [vmem:[#allocation2 + $0x1] sm:$0x1] %vm68, %v76
    %s78 = sld [smem:[#allocation4 + $0x2]]
    %s79 = sld [smem:[#allocation5 + $0x2]]
    %s80 = scalar_lea.vmem %s3, %s78
    %v81 = vld [vmem:[%s80] sm:$0x1]
    %s82 = scalar_lea.vmem [#allocation7], %s79
    %v83 = vld [vmem:[%s82] sm:$0x1]
    %v84 = vadd.f32 %v81, %v83
    %85 = vst.msk [vmem:[#allocation2 + $0x2] sm:$0x1] %vm68, %v84
    %s86 = sld [smem:[#allocation4 + $0x3]]
    %s87 = sld [smem:[#allocation5 + $0x3]]
    %s88 = scalar_lea.vmem %s3, %s86
    %v89 = vld [vmem:[%s88] sm:$0x1]
    %s90 = scalar_lea.vmem [#allocation7], %s87
    %v91 = vld [vmem:[%s90] sm:$0x1]
    %v92 = vadd.f32 %v89, %v91
    %93 = vst.msk [vmem:[#allocation2 + $0x3] sm:$0x1] %vm68, %v92
    %s94 = sld [smem:[#allocation4 + $0x4]]
    %s95 = sld [smem:[#allocation5 + $0x4]]
    %s96 = scalar_lea.vmem %s3, %s94
    %v97 = vld [vmem:[%s96] sm:$0x1]
    %s98 = scalar_lea.vmem [#allocation7], %s95
    %v99 = vld [vmem:[%s98] sm:$0x1]
    %v100 = vadd.f32 %v97, %v99
    %101 = vst.msk [vmem:[#allocation2 + $0x4] sm:$0x1] %vm68, %v100
    %s102 = sld [smem:[#allocation4 + $0x5]]
    %s103 = sld [smem:[#allocation5 + $0x5]]
    %s104 = scalar_lea.vmem %s3, %s102
    %v105 = vld [vmem:[%s104] sm:$0x1]
    %s106 = scalar_lea.vmem [#allocation7], %s103
    %v107 = vld [vmem:[%s106] sm:$0x1]
    %v108 = vadd.f32 %v105, %v107
    %109 = vst.msk [vmem:[#allocation2 + $0x5] sm:$0x1] %vm68, %v108
    %s110 = sld [smem:[#allocation4 + $0x6]]
    %s111 = sld [smem:[#allocation5 + $0x6]]
    %s112 = scalar_lea.vmem %s3, %s110
    %v113 = vld [vmem:[%s112] sm:$0x1]
    %s114 = scalar_lea.vmem [#allocation7], %s111
    %v115 = vld [vmem:[%s114] sm:$0x1]
    %v116 = vadd.f32 %v113, %v115
    %117 = vst.msk [vmem:[#allocation2 + $0x6] sm:$0x1] %vm68, %v116
    %s118 = sld [smem:[#allocation4 + $0x7]]
    %s119 = sld [smem:[#allocation5 + $0x7]]
    %s120 = scalar_lea.vmem %s3, %s118
    %v121 = vld [vmem:[%s120] sm:$0x1]
    %s122 = scalar_lea.vmem [#allocation7], %s119
    %v123 = vld [vmem:[%s122] sm:$0x1]
    %v124 = vadd.f32 %v121, %v123
    %125 = vst.msk [vmem:[#allocation2 + $0x7] sm:$0x1] %vm68, %v124
    %s126 = sld [smem:[#allocation4 + $0x80]]
    %s127 = sld [smem:[#allocation5 + $0x80]]
    %s128 = scalar_lea.vmem %s3, %s126
    %v129 = vld [vmem:[%s128] sm:$0x1]
    %s130 = scalar_lea.vmem [#allocation7], %s127
    %v131 = vld [vmem:[%s130] sm:$0x1]
    %v132 = vadd.f32 %v129, %v131
    %133 = vst.msk [vmem:[#allocation2 + $0x8] sm:$0x1] %vm68, %v132
    %s134 = sld [smem:[#allocation4 + $0x81]]
    %s135 = sld [smem:[#allocation5 + $0x81]]
    %s136 = scalar_lea.vmem %s3, %s134
    %v137 = vld [vmem:[%s136] sm:$0x1]
    %s138 = scalar_lea.vmem [#allocation7], %s135
    %v139 = vld [vmem:[%s138] sm:$0x1]
    %v140 = vadd.f32 %v137, %v139
    %141 = vst.msk [vmem:[#allocation2 + $0x9] sm:$0x1] %vm68, %v140
    %s142 = sld [smem:[#allocation4 + $0x82]]
    %s143 = sld [smem:[#allocation5 + $0x82]]
    %s144 = scalar_lea.vmem %s3, %s142
    %v145 = vld [vmem:[%s144] sm:$0x1]
    %s146 = scalar_lea.vmem [#allocation7], %s143
    %v147 = vld [vmem:[%s146] sm:$0x1]
    %v148 = vadd.f32 %v145, %v147
    %149 = vst.msk [vmem:[#allocation2 + $0xa] sm:$0x1] %vm68, %v148
    %s150 = sld [smem:[#allocation4 + $0x83]]
    %s151 = sld [smem:[#allocation5 + $0x83]]
    %s152 = scalar_lea.vmem %s3, %s150
    %v153 = vld [vmem:[%s152] sm:$0x1]
    %s154 = scalar_lea.vmem [#allocation7], %s151
    %v155 = vld [vmem:[%s154] sm:$0x1]
    %v156 = vadd.f32 %v153, %v155
    %157 = vst.msk [vmem:[#allocation2 + $0xb] sm:$0x1] %vm68, %v156
    %s158 = sld [smem:[#allocation4 + $0x84]]
    %s159 = sld [smem:[#allocation5 + $0x84]]
    %s160 = scalar_lea.vmem %s3, %s158
    %v161 = vld [vmem:[%s160] sm:$0x1]
    %s162 = scalar_lea.vmem [#allocation7], %s159
    %v163 = vld [vmem:[%s162] sm:$0x1]
    %v164 = vadd.f32 %v161, %v163
    %165 = vst.msk [vmem:[#allocation2 + $0xc] sm:$0x1] %vm68, %v164
    %s166 = sld [smem:[#allocation4 + $0x85]]
    %s167 = sld [smem:[#allocation5 + $0x85]]
    %s168 = scalar_lea.vmem %s3, %s166
    %v169 = vld [vmem:[%s168] sm:$0x1]
    %s170 = scalar_lea.vmem [#allocation7], %s167
    %v171 = vld [vmem:[%s170] sm:$0x1]
    %v172 = vadd.f32 %v169, %v171
    %173 = vst.msk [vmem:[#allocation2 + $0xd] sm:$0x1] %vm68, %v172
    %s174 = sld [smem:[#allocation4 + $0x86]]
    %s175 = sld [smem:[#allocation5 + $0x86]]
    %s176 = scalar_lea.vmem %s3, %s174
    %v177 = vld [vmem:[%s176] sm:$0x1]
    %s178 = scalar_lea.vmem [#allocation7], %s175
    %v179 = vld [vmem:[%s178] sm:$0x1]
    %v180 = vadd.f32 %v177, %v179
    %181 = vst.msk [vmem:[#allocation2 + $0xe] sm:$0x1] %vm68, %v180
    %s182 = sld [smem:[#allocation4 + $0x87]]
    %s183 = sld [smem:[#allocation5 + $0x87]]
    %s184 = scalar_lea.vmem %s3, %s182
    %v185 = vld [vmem:[%s184] sm:$0x1]
    %s186 = scalar_lea.vmem [#allocation7], %s183
    %v187 = vld [vmem:[%s186] sm:$0x1]
    %v188 = vadd.f32 %v185, %v187
    %189 = vst.msk [vmem:[#allocation2 + $0xf] sm:$0x1] %vm68, %v188
    %v190 = vlaneseq
    %v191 = vand.u32 %v190, 127
    %v192 = vlaneseq
    %v193 = vshrl.u32 %v192, 7
    %s194 = sld [smem:[#allocation6]]
    %p195 = scmp.gt.s32.totalorder %s194, 0
    %s196 = scalar_select %p195, %s194, 0
    %p197 = scmp.lt.s32.totalorder %s196, 8
    %s198 = scalar_select %p197, %s196, 8
    %p199 = scmp.gt.s32.totalorder %s198, 1
    %s200 = scalar_select %p199, %s198, 1
    %s201 = scvt.s32.f32 %s200
    %vm202 = vcmp.eq.s32.totalorder %v193, 0
    %vm203 = vcmp.ge.s32.totalorder %v191, 0
    %vm204 = vmand %vm202, %vm203
    %v205 = vstv %s198
    %vm206 = vcmp.lt.s32.totalorder %v191, %v205
    %vm207 = vmand %vm204, %vm206
    %v208 = vstv %s201
    %v209 = vrcp.pop %v208
    %s210 = vtos %v209
    %v211 = vstv %s210
    %v212 = vsel %vm207, %v211, 0.0
    %s213 = sld [smem:[#allocation6 + $0x1]]
    %p214 = scmp.gt.s32.totalorder %s213, 0
    %s215 = scalar_select %p214, %s213, 0
    %p216 = scmp.lt.s32.totalorder %s215, 8
    %s217 = scalar_select %p216, %s215, 8
    %p218 = scmp.gt.s32.totalorder %s217, 1
    %s219 = scalar_select %p218, %s217, 1
    %s220 = scvt.s32.f32 %s219
    %vm221 = vcmp.eq.s32.totalorder %v193, 1
    %vm222 = vcmp.ge.s32.totalorder %v191, 8
    %vm223 = vmand %vm221, %vm222
    %s224 = sadd.s32 %s217, 8
    %v225 = vstv %s224
    %vm226 = vcmp.lt.s32.totalorder %v191, %v225
    %vm227 = vmand %vm223, %vm226
    %v228 = vstv %s220
    %v229 = vrcp.pop %v228
    %s230 = vtos %v229
    %v231 = vstv %s230
    %v232 = vsel %vm227, %v231, %v212
    %v233 = vld [vmem:[#allocation2] sm:$0xff]
    %v234 = vld [vmem:[#allocation2 + $0x8] sm:$0xff]
    %vm235 = vcmask 130048
    %v237 = vsel %vm235, %v232, 0
    %239 = vmatprep.subr.mxu0 0.0
    %240 = vmatpush1.msra.mxu0 %v233
    %241 = vmatprep.subr.mxu0 0.0
    %242 = vmatpush1.msra.mxu0 %v234
    %243 = vmatprep.subr.mxu0 0.0
    %244 = vmatpush1.msra.mxu0 0.0
    %245 = vmatprep.subr.mxu0 0.0
    %246 = vmatpush1.msra.mxu0 0.0
    %247 = vmatprep.subr.mxu0 0.0
    %248 = vmatpush1.msra.mxu0 0.0
    %249 = vmatprep.subr.mxu0 0.0
    %250 = vmatpush1.msra.mxu0 0.0
    %251 = vmatprep.subr.mxu0 0.0
    %252 = vmatpush1.msra.mxu0 0.0
    %253 = vmatprep.subr.mxu0 0.0
    %254 = vmatpush1.msra.mxu0 0.0
    %255 = vmatprep.subr.mxu0 0.0
    %256 = vmatpush1.msra.mxu0 0.0
    %257 = vmatprep.subr.mxu0 0.0
    %258 = vmatpush1.msra.mxu0 0.0
    %259 = vmatprep.subr.mxu0 0.0
    %260 = vmatpush1.msra.mxu0 0.0
    %261 = vmatprep.subr.mxu0 0.0
    %262 = vmatpush1.msra.mxu0 0.0
    %263 = vmatprep.subr.mxu0 0.0
    %264 = vmatpush1.msra.mxu0 0.0
    %265 = vmatprep.subr.mxu0 0.0
    %266 = vmatpush1.msra.mxu0 0.0
    %267 = vmatprep.subr.mxu0 0.0
    %268 = vmatpush1.msra.mxu0 0.0
    %269 = vmatprep.subr.mxu0 0.0
    %270 = vmatpush1.msra.mxu0 0.0
    %271 = vmatprep.subr.mxu0 0.0
    %272 = vmatpush1.msra.mxu0 0.0
    %273 = vmatprep.subr.mxu0 0.0
    %274 = vmatpush1.msra.mxu0 0.0
    %275 = vmatprep.subr.mxu0 0.0
    %276 = vmatpush1.msra.mxu0 0.0
    %277 = vmatprep.subr.mxu0 0.0
    %278 = vmatpush1.msra.mxu0 0.0
    %279 = vmatprep.subr.mxu0 0.0
    %280 = vmatpush1.msra.mxu0 0.0
    %281 = vmatprep.subr.mxu0 0.0
    %282 = vmatpush1.msra.mxu0 0.0
    %283 = vmatprep.subr.mxu0 0.0
    %284 = vmatpush1.msra.mxu0 0.0
    %285 = vmatprep.subr.mxu0 0.0
    %286 = vmatpush1.msra.mxu0 0.0
    %287 = vmatprep.subr.mxu0 0.0
    %288 = vmatpush1.msra.mxu0 0.0
    %289 = vmatprep.subr.mxu0 0.0
    %290 = vmatpush1.msra.mxu0 0.0
    %291 = vmatprep.subr.mxu0 0.0
    %292 = vmatpush1.msra.mxu0 0.0
    %293 = vmatprep.subr.mxu0 0.0
    %294 = vmatpush1.msra.mxu0 0.0
    %295 = vmatprep.subr.mxu0 0.0
    %296 = vmatpush1.msra.mxu0 0.0
    %297 = vmatprep.subr.mxu0 0.0
    %298 = vmatpush1.msra.mxu0 0.0
    %299 = vmatprep.subr.mxu0 0.0
    %300 = vmatpush1.msra.mxu0 0.0
    %301 = vmatprep.subr.mxu0 0.0
    %302 = vmatpush1.msra.mxu0 0.0
    %303 = vmatprep.mubr.f32.mxu0 0.0
    %304 = vmatmul.mubr.f32.gmra.mrb[0].mxu0 %v237
    %v305 = vpop.f32.mrb[0].mxu0
    %v306 = vadd.f32 0.0, %v305
    %v307 = vpop.f32.mrb[0].mxu0
    %308 = vdwg.mxu0
    %v309 = vld [vmem:[%s5] sm:$0xff]
    %v310 = vld [vmem:[%s5 + $0x8] sm:$0xff]
    %v311 = vld [vmem:[%s5 + $0x10] sm:$0xff]
    %v312 = vld [vmem:[%s5 + $0x18] sm:$0xff]
    %v313 = vld [vmem:[#allocation10] sm:$0x1]
    %v315 = vlaneseq
    %v316 = vshrl.u32 %v315, 7
    %v317 = vsub.s32 0, %v316
    %v318 = vrot.slane %v313, %v317
    %vm320 = vcmask 261120
    %v322 = vsel %vm320, %v306, 0
    %324 = vmatprep.subr.mxu0 0.0
    %325 = vmatpush1.msra.mxu0 %v309
    %326 = vmatprep.subr.mxu0 0.0
    %327 = vmatpush1.msra.mxu0 %v310
    %328 = vmatprep.subr.mxu0 0.0
    %329 = vmatpush1.msra.mxu0 %v311
    %330 = vmatprep.subr.mxu0 0.0
    %331 = vmatpush1.msra.mxu0 %v312
    %332 = vmatprep.subr.mxu0 0.0
    %333 = vmatpush1.msra.mxu0 0.0
    %334 = vmatprep.subr.mxu0 0.0
    %335 = vmatpush1.msra.mxu0 0.0
    %336 = vmatprep.subr.mxu0 0.0
    %337 = vmatpush1.msra.mxu0 0.0
    %338 = vmatprep.subr.mxu0 0.0
    %339 = vmatpush1.msra.mxu0 0.0
    %340 = vmatprep.subr.mxu0 0.0
    %341 = vmatpush1.msra.mxu0 0.0
    %342 = vmatprep.subr.mxu0 0.0
    %343 = vmatpush1.msra.mxu0 0.0
    %344 = vmatprep.subr.mxu0 0.0
    %345 = vmatpush1.msra.mxu0 0.0
    %346 = vmatprep.subr.mxu0 0.0
    %347 = vmatpush1.msra.mxu0 0.0
    %348 = vmatprep.subr.mxu0 0.0
    %349 = vmatpush1.msra.mxu0 0.0
    %350 = vmatprep.subr.mxu0 0.0
    %351 = vmatpush1.msra.mxu0 0.0
    %352 = vmatprep.subr.mxu0 0.0
    %353 = vmatpush1.msra.mxu0 0.0
    %354 = vmatprep.subr.mxu0 0.0
    %355 = vmatpush1.msra.mxu0 0.0
    %356 = vmatprep.subr.mxu0 0.0
    %357 = vmatpush1.msra.mxu0 0.0
    %358 = vmatprep.subr.mxu0 0.0
    %359 = vmatpush1.msra.mxu0 0.0
    %360 = vmatprep.subr.mxu0 0.0
    %361 = vmatpush1.msra.mxu0 0.0
    %362 = vmatprep.subr.mxu0 0.0
    %363 = vmatpush1.msra.mxu0 0.0
    %364 = vmatprep.subr.mxu0 0.0
    %365 = vmatpush1.msra.mxu0 0.0
    %366 = vmatprep.subr.mxu0 0.0
    %367 = vmatpush1.msra.mxu0 0.0
    %368 = vmatprep.subr.mxu0 0.0
    %369 = vmatpush1.msra.mxu0 0.0
    %370 = vmatprep.subr.mxu0 0.0
    %371 = vmatpush1.msra.mxu0 0.0
    %372 = vmatprep.subr.mxu0 0.0
    %373 = vmatpush1.msra.mxu0 0.0
    %374 = vmatprep.subr.mxu0 0.0
    %375 = vmatpush1.msra.mxu0 0.0
    %376 = vmatprep.subr.mxu0 0.0
    %377 = vmatpush1.msra.mxu0 0.0
    %378 = vmatprep.subr.mxu0 0.0
    %379 = vmatpush1.msra.mxu0 0.0
    %380 = vmatprep.subr.mxu0 0.0
    %381 = vmatpush1.msra.mxu0 0.0
    %382 = vmatprep.subr.mxu0 0.0
    %383 = vmatpush1.msra.mxu0 0.0
    %384 = vmatprep.subr.mxu0 0.0
    %385 = vmatpush1.msra.mxu0 0.0
    %386 = vmatprep.subr.mxu0 0.0
    %387 = vmatpush1.msra.mxu0 0.0
    %388 = vmatprep.mubr.f32.mxu0 0.0
    %389 = vmatmul.mubr.f32.gmra.mrb[0].mxu0 %v322
    %v390 = vpop.f32.mrb[0].mxu0
    %v391 = vadd.f32 %v318, %v390
    %v392 = vpop.f32.mrb[0].mxu0
    %393 = vdwg.mxu0
    %v394 = vtanh.pop %v391
    %v395 = vld [vmem:[%s7] sm:$0xff]
    %v396 = vld [vmem:[%s7 + $0x8] sm:$0xff]
    %v397 = vld [vmem:[%s7 + $0x10] sm:$0xff]
    %v398 = vld [vmem:[%s7 + $0x18] sm:$0xff]
    %v399 = vld [vmem:[%s7 + $0x20] sm:$0xff]
    %v400 = vld [vmem:[%s7 + $0x28] sm:$0xff]
    %v401 = vld [vmem:[%s7 + $0x30] sm:$0xff]
    %v402 = vld [vmem:[%s7 + $0x38] sm:$0xff]
    %v403 = vld [vmem:[%s7 + $0x40] sm:$0xff]
    %v404 = vld [vmem:[%s7 + $0x48] sm:$0xff]
    %v405 = vld [vmem:[%s7 + $0x50] sm:$0xff]
    %v406 = vld [vmem:[%s7 + $0x58] sm:$0xff]
    %v407 = vld [vmem:[%s7 + $0x60] sm:$0xff]
    %v408 = vld [vmem:[%s7 + $0x68] sm:$0xff]
    %v409 = vld [vmem:[%s7 + $0x70] sm:$0xff]
    %v410 = vld [vmem:[%s7 + $0x78] sm:$0xff]
    %v411 = vld [vmem:[%s8] sm:$0x1]
    %v413 = vlaneseq
    %v414 = vshrl.u32 %v413, 7
    %v415 = vsub.s32 0, %v414
    %v416 = vrot.slane %v411, %v415
    %418 = vmatprep.subr.mxu0 0.0
    %419 = vmatpush1.msra.mxu0 %v395
    %420 = vmatprep.subr.mxu0 0.0
    %421 = vmatpush1.msra.mxu0 %v396
    %422 = vmatprep.subr.mxu0 0.0
    %423 = vmatpush1.msra.mxu0 %v397
    %424 = vmatprep.subr.mxu0 0.0
    %425 = vmatpush1.msra.mxu0 %v398
    %426 = vmatprep.subr.mxu0 0.0
    %427 = vmatpush1.msra.mxu0 %v399
    %428 = vmatprep.subr.mxu0 0.0
    %429 = vmatpush1.msra.mxu0 %v400
    %430 = vmatprep.subr.mxu0 0.0
    %431 = vmatpush1.msra.mxu0 %v401
    %432 = vmatprep.subr.mxu0 0.0
    %433 = vmatpush1.msra.mxu0 %v402
    %434 = vmatprep.subr.mxu0 0.0
    %435 = vmatpush1.msra.mxu0 %v403
    %436 = vmatprep.subr.mxu0 0.0
    %437 = vmatpush1.msra.mxu0 %v404
    %438 = vmatprep.subr.mxu0 0.0
    %439 = vmatpush1.msra.mxu0 %v405
    %440 = vmatprep.subr.mxu0 0.0
    %441 = vmatpush1.msra.mxu0 %v406
    %442 = vmatprep.subr.mxu0 0.0
    %443 = vmatpush1.msra.mxu0 %v407
    %444 = vmatprep.subr.mxu0 0.0
    %445 = vmatpush1.msra.mxu0 %v408
    %446 = vmatprep.subr.mxu0 0.0
    %447 = vmatpush1.msra.mxu0 %v409
    %448 = vmatprep.subr.mxu0 0.0
    %449 = vmatpush1.msra.mxu0 %v410
    %450 = vmatprep.subr.mxu0 0.0
    %451 = vmatpush1.msra.mxu0 0.0
    %452 = vmatprep.subr.mxu0 0.0
    %453 = vmatpush1.msra.mxu0 0.0
    %454 = vmatprep.subr.mxu0 0.0
    %455 = vmatpush1.msra.mxu0 0.0
    %456 = vmatprep.subr.mxu0 0.0
    %457 = vmatpush1.msra.mxu0 0.0
    %458 = vmatprep.subr.mxu0 0.0
    %459 = vmatpush1.msra.mxu0 0.0
    %460 = vmatprep.subr.mxu0 0.0
    %461 = vmatpush1.msra.mxu0 0.0
    %462 = vmatprep.subr.mxu0 0.0
    %463 = vmatpush1.msra.mxu0 0.0
    %464 = vmatprep.subr.mxu0 0.0
    %465 = vmatpush1.msra.mxu0 0.0
    %466 = vmatprep.subr.mxu0 0.0
    %467 = vmatpush1.msra.mxu0 0.0
    %468 = vmatprep.subr.mxu0 0.0
    %469 = vmatpush1.msra.mxu0 0.0
    %470 = vmatprep.subr.mxu0 0.0
    %471 = vmatpush1.msra.mxu0 0.0
    %472 = vmatprep.subr.mxu0 0.0
    %473 = vmatpush1.msra.mxu0 0.0
    %474 = vmatprep.subr.mxu0 0.0
    %475 = vmatpush1.msra.mxu0 0.0
    %476 = vmatprep.subr.mxu0 0.0
    %477 = vmatpush1.msra.mxu0 0.0
    %478 = vmatprep.subr.mxu0 0.0
    %479 = vmatpush1.msra.mxu0 0.0
    %480 = vmatprep.subr.mxu0 0.0
    %481 = vmatpush1.msra.mxu0 0.0
    %482 = vmatprep.mubr.f32.mxu0 0.0
    %483 = vmatmul.mubr.f32.gmra.mrb[0].mxu0 %v394
    %v484 = vpop.f32.mrb[0].mxu0
    %v485 = vadd.f32 %v416, %v484
    %v486 = vpop.f32.mrb[0].mxu0
    %487 = vdwg.mxu0
    %488 = vst [vmem:[#allocation12] sm:$0x3] %v485
    // Predicated region
    $region34: #{tpu_custom_call.1} parent=1 // pred_check
      _
    $region35: #{tpu_custom_call.1} parent=1 // pred_check_branch
      %490 = sbr.rel (0) target = $region37
    $region36: #{tpu_custom_call.1} parent=1 // pred_region
      %s492 = ssub.s32 32, 32
      %493 = vsyncadd [#allocation9], %s492
      %s495 = sshll.u32 [#allocation12], 4
      %s496 = int_to_ptr.vmem [resolvable:$true] %s495
      %498 = dma.vmem_to_hbm [thread:$0]  %s496, 32, %s9, [#allocation9]
    $region37: #{tpu_custom_call.1} parent=1 // pred_fallthru
      _
    // Predicated region
    $region38: #{tpu_custom_call.1} parent=1 // pred_check
      _
    $region39: #{tpu_custom_call.1} parent=1 // pred_check_branch
      %500 = sbr.rel (0) target = $region41
    $region40: #{tpu_custom_call.1} parent=1 // pred_region
      %501 = dma.done [#allocation9], 32
    $region41: #{tpu_custom_call.1} parent=1 // pred_fallthru
      _
    %502 = vsyncpa [#allocation8], 1
    %503 = vsyncpa [#allocation11], 1
    %504 = vsyncpa [#allocation9], 1

</llo_original>
